<compile_context>
chip_gen: v7x
topology: tpu7x:2x2x1
jax: 0.10.0
libtpu: 0.0.40
codegen_flags: <defaults>
</compile_context>

<pallas_src>
import functools

import jax
import jax.numpy as jnp
import numpy as np
from jax.experimental import pallas as pl
from jax.experimental.pallas import tpu as pltpu


def _round_up(n: int, m: int) -> int:
    return ((n + m - 1) // m) * m


def _pad2d(a, rows: int, cols: int):
    r, c = a.shape
    if r == rows and c == cols:
        return a
    return jnp.pad(a, ((0, rows - r), (0, cols - c)))


def _fused_fc_net_kernel(layer_cfgs, b_true, eps, *refs):
    """Fused forward: [Linear (+BN over batch) (+ReLU)] x num_fc, all in VMEM.

    refs = (x_ref, then per layer: w_ref, b_ref[, gamma_ref, beta_ref], ..., o_ref)
    layer_cfgs = tuple of (apply_bn, apply_relu) per layer (static).
    """
    x_ref = refs[0]
    o_ref = refs[-1]
    prefs = refs[1:-1]

    h = x_ref[...]                                   # (Bp, F0p) f32
    bp = h.shape[0]

    # Row mask only needed if the batch axis was padded (BN stats must ignore pad rows).
    need_mask = bp != b_true
    if need_mask:
        row_ids = jax.lax.broadcasted_iota(jnp.int32, (bp, 1), 0)
        row_mask = (row_ids < b_true).astype(jnp.float32)
    inv_b = jnp.float32(1.0 / b_true)

    idx = 0
    for apply_bn, apply_relu in layer_cfgs:
        w = prefs[idx][...]; idx += 1                # (Finp, Foutp) bf16
        b = prefs[idx][...]; idx += 1                # (1, Foutp)   f32
        # MXU matmul in bf16 with f32 accumulation; epilogue in f32.
        y = jnp.dot(h.astype(jnp.bfloat16), w,
                    preferred_element_type=jnp.float32) + b

        if apply_bn:
            gamma = prefs[idx][...]; idx += 1        # (1, Foutp) f32
            beta = prefs[idx][...]; idx += 1         # (1, Foutp) f32
            # PyTorch BatchNorm1d (training): biased batch variance, eps inside sqrt.
            if need_mask:
                mean = jnp.sum(y * row_mask, axis=0, keepdims=True) * inv_b
                diff = (y - mean) * row_mask
            else:
                mean = jnp.sum(y, axis=0, keepdims=True) * inv_b
                diff = y - mean
            var = jnp.sum(diff * diff, axis=0, keepdims=True) * inv_b
            y = gamma * (y - mean) * jax.lax.rsqrt(var + eps) + beta

        if apply_relu:
            y = jnp.maximum(y, 0.0)
        h = y

    o_ref[...] = h.astype(o_ref.dtype)               # lane-dense (Bp, F_last_p) store


def fcmsanet_forward(x, params, batchnorm=True, eps=1e-5):
    """Full network forward through a single fused pallas_call."""
    B, F0 = x.shape
    num_fc = len(params)
    feats = [F0] + [int(p["w"].shape[1]) for p in params]
    featsp = [max(_round_up(f, 128), 128) for f in feats]
    Bp = _round_up(B, 8)

    ops = [_pad2d(x.astype(jnp.float32), Bp, featsp[0])]
    specs = [pl.BlockSpec((Bp, featsp[0]), lambda i: (0, 0))]
    layer_cfgs = []
    for li, p in enumerate(params):
        is_last = li == num_fc - 1
        apply_bn = bool(batchnorm) and not is_last
        apply_relu = not is_last
        layer_cfgs.append((apply_bn, apply_relu))
        finp, foutp = featsp[li], featsp[li + 1]

        ops.append(_pad2d(p["w"], finp, foutp).astype(jnp.bfloat16))
        specs.append(pl.BlockSpec((finp, foutp), lambda i: (0, 0)))
        ops.append(_pad2d(p["b"].astype(jnp.float32), 1, foutp))
        specs.append(pl.BlockSpec((1, foutp), lambda i: (0, 0)))
        if apply_bn:
            ops.append(_pad2d(p["gamma"].astype(jnp.float32), 1, foutp))
            specs.append(pl.BlockSpec((1, foutp), lambda i: (0, 0)))
            ops.append(_pad2d(p["beta"].astype(jnp.float32), 1, foutp))
            specs.append(pl.BlockSpec((1, foutp), lambda i: (0, 0)))

    kernel = functools.partial(_fused_fc_net_kernel, tuple(layer_cfgs), B, float(eps))
    out_p = pl.pallas_call(
        kernel,
        out_shape=jax.ShapeDtypeStruct((Bp, featsp[-1]), jnp.float32),
        grid=(1,),
        in_specs=specs,
        out_specs=pl.BlockSpec((Bp, featsp[-1]), lambda i: (0, 0)),
        compiler_params=pltpu.CompilerParams(
            dimension_semantics=("arbitrary",),
            vmem_limit_bytes=32 * 1024 * 1024,
        ),
    )(*ops)
    return out_p[:B, :feats[-1]]


def init_fcmsanet(key, num_fc, sizes_fc, bias=True):
    """Deterministic parameters matching the module's layer shapes.

    Returns a list of per-block dicts: w (Fin,Fout), b/gamma/beta (1,Fout)."""
    assert len(sizes_fc) == num_fc + 1
    params = []
    for li in range(num_fc):
        fin, fout = int(sizes_fc[li]), int(sizes_fc[li + 1])
        key, kw, kb = jax.random.split(key, 3)
        bound = 1.0 / np.sqrt(fin)
        w = jax.random.uniform(kw, (fin, fout), jnp.float32, -bound, bound)
        if bias:
            b = jax.random.uniform(kb, (1, fout), jnp.float32, -bound, bound)
        else:
            b = jnp.zeros((1, fout), jnp.float32)
        gamma = jnp.ones((1, fout), jnp.float32)
        beta = jnp.zeros((1, fout), jnp.float32)
        params.append(dict(w=w, b=b, gamma=gamma, beta=beta))
    return params


def _reference_forward(x, params, batchnorm=True, eps=1e-5):
    """Pure-JAX reference (same bf16-matmul / f32-epilogue numerics as the kernel)."""
    num_fc = len(params)
    h = x.astype(jnp.float32)
    for li, p in enumerate(params):
        is_last = li == num_fc - 1
        y = jnp.dot(h.astype(jnp.bfloat16), p["w"].astype(jnp.bfloat16),
                    preferred_element_type=jnp.float32) + p["b"]
        if batchnorm and not is_last:
            mean = jnp.mean(y, axis=0, keepdims=True)
            var = jnp.mean((y - mean) ** 2, axis=0, keepdims=True)
            y = p["gamma"] * (y - mean) * jax.lax.rsqrt(var + eps) + p["beta"]
        if not is_last:
            y = jnp.maximum(y, 0.0)
        h = y
    return h


if __name__ == "__main__":
    key = jax.random.PRNGKey(0)
    key, kx, kp = jax.random.split(key, 3)

    # Small config consistent with the module: num_fc=3 Linear blocks, sizes_fc len 4.
    num_fc = 3
    sizes_fc = [32, 64, 32, 16]
    batch = 8

    x = jax.random.normal(kx, (batch, sizes_fc[0]), jnp.float32)
    params = init_fcmsanet(kp, num_fc, sizes_fc, bias=True)

    out = fcmsanet_forward(x, params, batchnorm=True)
    out = jax.block_until_ready(out)

    ref = jax.block_until_ready(_reference_forward(x, params, batchnorm=True))
    assert out.shape == (batch, sizes_fc[-1])
    np.testing.assert_allclose(np.asarray(out), np.asarray(ref), rtol=1e-3, atol=1e-3)

    print("KERNEL_OK")
</pallas_src>

<mosaic_0001>
module attributes {stable_mosaic.version = 11 : i64} {
  func.func @_fused_fc_net_kernel(%arg0: i32, %arg1: memref<8x128xf32, #tpu.memory_space<vmem>>, %arg2: memref<128x128xbf16, #tpu.memory_space<vmem>>, %arg3: memref<1x128xf32, #tpu.memory_space<vmem>>, %arg4: memref<1x128xf32, #tpu.memory_space<vmem>>, %arg5: memref<1x128xf32, #tpu.memory_space<vmem>>, %arg6: memref<128x128xbf16, #tpu.memory_space<vmem>>, %arg7: memref<1x128xf32, #tpu.memory_space<vmem>>, %arg8: memref<1x128xf32, #tpu.memory_space<vmem>>, %arg9: memref<1x128xf32, #tpu.memory_space<vmem>>, %arg10: memref<128x128xbf16, #tpu.memory_space<vmem>>, %arg11: memref<1x128xf32, #tpu.memory_space<vmem>>, %arg12: memref<8x128xf32, #tpu.memory_space<vmem>>) attributes {dimension_semantics = [#tpu.dimension_semantics<arbitrary>], iteration_bounds = array<i64: 1>, scalar_prefetch = 0 : i64, scratch_operands = 0 : i64, tpu.core_type = #tpu.core_type<tc>, window_params = [{pipeline_mode = #tpu.pipeline_mode<synchronous>, transform_indices = @transform_0, window_bounds = array<i64: 8, 128>}, {pipeline_mode = #tpu.pipeline_mode<synchronous>, transform_indices = @transform_1, window_bounds = array<i64: 128, 128>}, {pipeline_mode = #tpu.pipeline_mode<synchronous>, transform_indices = @transform_2, window_bounds = array<i64: 1, 128>}, {pipeline_mode = #tpu.pipeline_mode<synchronous>, transform_indices = @transform_3, window_bounds = array<i64: 1, 128>}, {pipeline_mode = #tpu.pipeline_mode<synchronous>, transform_indices = @transform_4, window_bounds = array<i64: 1, 128>}, {pipeline_mode = #tpu.pipeline_mode<synchronous>, transform_indices = @transform_5, window_bounds = array<i64: 128, 128>}, {pipeline_mode = #tpu.pipeline_mode<synchronous>, transform_indices = @transform_6, window_bounds = array<i64: 1, 128>}, {pipeline_mode = #tpu.pipeline_mode<synchronous>, transform_indices = @transform_7, window_bounds = array<i64: 1, 128>}, {pipeline_mode = #tpu.pipeline_mode<synchronous>, transform_indices = @transform_8, window_bounds = array<i64: 1, 128>}, {pipeline_mode = #tpu.pipeline_mode<synchronous>, transform_indices = @transform_9, window_bounds = array<i64: 128, 128>}, {pipeline_mode = #tpu.pipeline_mode<synchronous>, transform_indices = @transform_10, window_bounds = array<i64: 1, 128>}, {pipeline_mode = #tpu.pipeline_mode<synchronous>, transform_indices = @transform_11, window_bounds = array<i64: 8, 128>}]} {
    %c0 = arith.constant 0 : index
    %c0_0 = arith.constant 0 : index
    %0 = vector.load %arg1[%c0, %c0_0] : memref<8x128xf32, #tpu.memory_space<vmem>>, vector<8x128xf32>
    %c0_1 = arith.constant 0 : index
    %c0_2 = arith.constant 0 : index
    %1 = vector.load %arg2[%c0_1, %c0_2] : memref<128x128xbf16, #tpu.memory_space<vmem>>, vector<128x128xbf16>
    %c0_3 = arith.constant 0 : index
    %c0_4 = arith.constant 0 : index
    %2 = vector.load %arg3[%c0_3, %c0_4] : memref<1x128xf32, #tpu.memory_space<vmem>>, vector<1x128xf32>
    %3 = arith.truncf %0 : vector<8x128xf32> to vector<8x128xbf16>
    %cst = arith.constant dense<0.000000e+00> : vector<8x128xf32>
    %4 = tpu.matmul %3, %1, %cst {dimension_numbers = #tpu.dot_dimension_numbers<[1], [0], [0], [1], [0, 0, 1, 1], [], []>} : vector<8x128xbf16>, vector<128x128xbf16>, vector<8x128xf32> -> vector<8x128xf32>
    %5 = vector.broadcast %2 : vector<1x128xf32> to vector<8x128xf32>
    %6 = arith.addf %4, %5 : vector<8x128xf32>
    %c0_5 = arith.constant 0 : index
    %c0_6 = arith.constant 0 : index
    %7 = vector.load %arg4[%c0_5, %c0_6] : memref<1x128xf32, #tpu.memory_space<vmem>>, vector<1x128xf32>
    %c0_7 = arith.constant 0 : index
    %c0_8 = arith.constant 0 : index
    %8 = vector.load %arg5[%c0_7, %c0_8] : memref<1x128xf32, #tpu.memory_space<vmem>>, vector<1x128xf32>
    %cst_9 = arith.constant dense<0.000000e+00> : vector<128xf32>
    %9 = vector.multi_reduction <add>, %6, %cst_9 [0] : vector<8x128xf32> to vector<128xf32>
    %10 = vector.shape_cast %9 : vector<128xf32> to vector<1x128xf32>
    %cst_10 = arith.constant 1.250000e-01 : f32
    %11 = vector.broadcast %cst_10 : f32 to vector<1x128xf32>
    %12 = arith.mulf %10, %11 : vector<1x128xf32>
    %13 = vector.broadcast %12 : vector<1x128xf32> to vector<8x128xf32>
    %14 = arith.subf %6, %13 : vector<8x128xf32>
    %15 = arith.mulf %14, %14 : vector<8x128xf32>
    %cst_11 = arith.constant dense<0.000000e+00> : vector<128xf32>
    %16 = vector.multi_reduction <add>, %15, %cst_11 [0] : vector<8x128xf32> to vector<128xf32>
    %17 = vector.shape_cast %16 : vector<128xf32> to vector<1x128xf32>
    %cst_12 = arith.constant 1.250000e-01 : f32
    %18 = vector.broadcast %cst_12 : f32 to vector<1x128xf32>
    %19 = arith.mulf %17, %18 : vector<1x128xf32>
    %20 = vector.broadcast %12 : vector<1x128xf32> to vector<8x128xf32>
    %21 = arith.subf %6, %20 : vector<8x128xf32>
    %22 = vector.broadcast %7 : vector<1x128xf32> to vector<8x128xf32>
    %23 = arith.mulf %22, %21 : vector<8x128xf32>
    %cst_13 = arith.constant 9.99999974E-6 : f32
    %24 = vector.broadcast %cst_13 : f32 to vector<1x128xf32>
    %25 = arith.addf %19, %24 : vector<1x128xf32>
    %26 = math.rsqrt %25 : vector<1x128xf32>
    %27 = vector.broadcast %26 : vector<1x128xf32> to vector<8x128xf32>
    %28 = arith.mulf %23, %27 : vector<8x128xf32>
    %29 = vector.broadcast %8 : vector<1x128xf32> to vector<8x128xf32>
    %30 = arith.addf %28, %29 : vector<8x128xf32>
    %cst_14 = arith.constant 0.000000e+00 : f32
    %31 = vector.broadcast %cst_14 : f32 to vector<8x128xf32>
    %32 = arith.maximumf %30, %31 : vector<8x128xf32>
    %c0_15 = arith.constant 0 : index
    %c0_16 = arith.constant 0 : index
    %33 = vector.load %arg6[%c0_15, %c0_16] : memref<128x128xbf16, #tpu.memory_space<vmem>>, vector<128x128xbf16>
    %c0_17 = arith.constant 0 : index
    %c0_18 = arith.constant 0 : index
    %34 = vector.load %arg7[%c0_17, %c0_18] : memref<1x128xf32, #tpu.memory_space<vmem>>, vector<1x128xf32>
    %35 = arith.truncf %32 : vector<8x128xf32> to vector<8x128xbf16>
    %cst_19 = arith.constant dense<0.000000e+00> : vector<8x128xf32>
    %36 = tpu.matmul %35, %33, %cst_19 {dimension_numbers = #tpu.dot_dimension_numbers<[1], [0], [0], [1], [0, 0, 1, 1], [], []>} : vector<8x128xbf16>, vector<128x128xbf16>, vector<8x128xf32> -> vector<8x128xf32>
    %37 = vector.broadcast %34 : vector<1x128xf32> to vector<8x128xf32>
    %38 = arith.addf %36, %37 : vector<8x128xf32>
    %c0_20 = arith.constant 0 : index
    %c0_21 = arith.constant 0 : index
    %39 = vector.load %arg8[%c0_20, %c0_21] : memref<1x128xf32, #tpu.memory_space<vmem>>, vector<1x128xf32>
    %c0_22 = arith.constant 0 : index
    %c0_23 = arith.constant 0 : index
    %40 = vector.load %arg9[%c0_22, %c0_23] : memref<1x128xf32, #tpu.memory_space<vmem>>, vector<1x128xf32>
    %cst_24 = arith.constant dense<0.000000e+00> : vector<128xf32>
    %41 = vector.multi_reduction <add>, %38, %cst_24 [0] : vector<8x128xf32> to vector<128xf32>
    %42 = vector.shape_cast %41 : vector<128xf32> to vector<1x128xf32>
    %cst_25 = arith.constant 1.250000e-01 : f32
    %43 = vector.broadcast %cst_25 : f32 to vector<1x128xf32>
    %44 = arith.mulf %42, %43 : vector<1x128xf32>
    %45 = vector.broadcast %44 : vector<1x128xf32> to vector<8x128xf32>
    %46 = arith.subf %38, %45 : vector<8x128xf32>
    %47 = arith.mulf %46, %46 : vector<8x128xf32>
    %cst_26 = arith.constant dense<0.000000e+00> : vector<128xf32>
    %48 = vector.multi_reduction <add>, %47, %cst_26 [0] : vector<8x128xf32> to vector<128xf32>
    %49 = vector.shape_cast %48 : vector<128xf32> to vector<1x128xf32>
    %cst_27 = arith.constant 1.250000e-01 : f32
    %50 = vector.broadcast %cst_27 : f32 to vector<1x128xf32>
    %51 = arith.mulf %49, %50 : vector<1x128xf32>
    %52 = vector.broadcast %44 : vector<1x128xf32> to vector<8x128xf32>
    %53 = arith.subf %38, %52 : vector<8x128xf32>
    %54 = vector.broadcast %39 : vector<1x128xf32> to vector<8x128xf32>
    %55 = arith.mulf %54, %53 : vector<8x128xf32>
    %cst_28 = arith.constant 9.99999974E-6 : f32
    %56 = vector.broadcast %cst_28 : f32 to vector<1x128xf32>
    %57 = arith.addf %51, %56 : vector<1x128xf32>
    %58 = math.rsqrt %57 : vector<1x128xf32>
    %59 = vector.broadcast %58 : vector<1x128xf32> to vector<8x128xf32>
    %60 = arith.mulf %55, %59 : vector<8x128xf32>
    %61 = vector.broadcast %40 : vector<1x128xf32> to vector<8x128xf32>
    %62 = arith.addf %60, %61 : vector<8x128xf32>
    %cst_29 = arith.constant 0.000000e+00 : f32
    %63 = vector.broadcast %cst_29 : f32 to vector<8x128xf32>
    %64 = arith.maximumf %62, %63 : vector<8x128xf32>
    %c0_30 = arith.constant 0 : index
    %c0_31 = arith.constant 0 : index
    %65 = vector.load %arg10[%c0_30, %c0_31] : memref<128x128xbf16, #tpu.memory_space<vmem>>, vector<128x128xbf16>
    %c0_32 = arith.constant 0 : index
    %c0_33 = arith.constant 0 : index
    %66 = vector.load %arg11[%c0_32, %c0_33] : memref<1x128xf32, #tpu.memory_space<vmem>>, vector<1x128xf32>
    %67 = arith.truncf %64 : vector<8x128xf32> to vector<8x128xbf16>
    %cst_34 = arith.constant dense<0.000000e+00> : vector<8x128xf32>
    %68 = tpu.matmul %67, %65, %cst_34 {dimension_numbers = #tpu.dot_dimension_numbers<[1], [0], [0], [1], [0, 0, 1, 1], [], []>} : vector<8x128xbf16>, vector<128x128xbf16>, vector<8x128xf32> -> vector<8x128xf32>
    %69 = vector.broadcast %66 : vector<1x128xf32> to vector<8x128xf32>
    %70 = arith.addf %68, %69 : vector<8x128xf32>
    %c0_35 = arith.constant 0 : index
    %c0_36 = arith.constant 0 : index
    %71 = vector.load %arg12[%c0_35, %c0_36] : memref<8x128xf32, #tpu.memory_space<vmem>>, vector<8x128xf32>
    tpu.vector_store %arg12[%c0_35, %c0_36], %70 {strides = array<i32>} : memref<8x128xf32, #tpu.memory_space<vmem>>, vector<8x128xf32>,
    return
  }
  func.func @transform_0(%arg0: i32) -> (i32, i32) {
    %c0_i32 = arith.constant 0 : i32
    %c0_i32_0 = arith.constant 0 : i32
    %c0_i32_1 = arith.constant 0 : i32
    return %c0_i32, %c0_i32_0 : i32, i32
  }
  func.func @transform_1(%arg0: i32) -> (i32, i32) {
    %c0_i32 = arith.constant 0 : i32
    %c0_i32_0 = arith.constant 0 : i32
    %c0_i32_1 = arith.constant 0 : i32
    return %c0_i32, %c0_i32_0 : i32, i32
  }
  func.func @transform_2(%arg0: i32) -> (i32, i32) {
    %c0_i32 = arith.constant 0 : i32
    %c0_i32_0 = arith.constant 0 : i32
    %c0_i32_1 = arith.constant 0 : i32
    return %c0_i32, %c0_i32_0 : i32, i32
  }
  func.func @transform_3(%arg0: i32) -> (i32, i32) {
    %c0_i32 = arith.constant 0 : i32
    %c0_i32_0 = arith.constant 0 : i32
    %c0_i32_1 = arith.constant 0 : i32
    return %c0_i32, %c0_i32_0 : i32, i32
  }
  func.func @transform_4(%arg0: i32) -> (i32, i32) {
    %c0_i32 = arith.constant 0 : i32
    %c0_i32_0 = arith.constant 0 : i32
    %c0_i32_1 = arith.constant 0 : i32
    return %c0_i32, %c0_i32_0 : i32, i32
  }
  func.func @transform_5(%arg0: i32) -> (i32, i32) {
    %c0_i32 = arith.constant 0 : i32
    %c0_i32_0 = arith.constant 0 : i32
    %c0_i32_1 = arith.constant 0 : i32
    return %c0_i32, %c0_i32_0 : i32, i32
  }
  func.func @transform_6(%arg0: i32) -> (i32, i32) {
    %c0_i32 = arith.constant 0 : i32
    %c0_i32_0 = arith.constant 0 : i32
    %c0_i32_1 = arith.constant 0 : i32
    return %c0_i32, %c0_i32_0 : i32, i32
  }
  func.func @transform_7(%arg0: i32) -> (i32, i32) {
    %c0_i32 = arith.constant 0 : i32
    %c0_i32_0 = arith.constant 0 : i32
    %c0_i32_1 = arith.constant 0 : i32
    return %c0_i32, %c0_i32_0 : i32, i32
  }
  func.func @transform_8(%arg0: i32) -> (i32, i32) {
    %c0_i32 = arith.constant 0 : i32
    %c0_i32_0 = arith.constant 0 : i32
    %c0_i32_1 = arith.constant 0 : i32
    return %c0_i32, %c0_i32_0 : i32, i32
  }
  func.func @transform_9(%arg0: i32) -> (i32, i32) {
    %c0_i32 = arith.constant 0 : i32
    %c0_i32_0 = arith.constant 0 : i32
    %c0_i32_1 = arith.constant 0 : i32
    return %c0_i32, %c0_i32_0 : i32, i32
  }
  func.func @transform_10(%arg0: i32) -> (i32, i32) {
    %c0_i32 = arith.constant 0 : i32
    %c0_i32_0 = arith.constant 0 : i32
    %c0_i32_1 = arith.constant 0 : i32
    return %c0_i32, %c0_i32_0 : i32, i32
  }
  func.func @transform_11(%arg0: i32) -> (i32, i32) {
    %c0_i32 = arith.constant 0 : i32
    %c0_i32_0 = arith.constant 0 : i32
    %c0_i32_1 = arith.constant 0 : i32
    return %c0_i32, %c0_i32_0 : i32, i32
  }
}

</mosaic_0001>

<llo_original>
// kernel: tpu_custom_call.1
$region0: #{tpu_custom_call.1}
  #allocation0 [shape = 'u32[]', space=smem, size = 0x4, offset = 0x4, fixed_abs, tag = 'smem constant byte address 0x4 - core index']
  #allocation1 [shape = 'u32[144,128]{1,0:T(1,128)}', space=vmem, size = 0x12000, scoped, tag = 'internal scratch']
  %s0 = inlined_call_operand.hbm [shape: f32[8,128], index: 0, kind: input, shape index: {}]
  %s1 = inlined_call_operand.hbm [shape: bf16[128,128], index: 1, kind: input, shape index: {}]
  %s2 = inlined_call_operand.vmem [shape: f32[1,128], index: 2, kind: input, shape index: {}]
  %s3 = inlined_call_operand.vmem [shape: f32[1,128], index: 3, kind: input, shape index: {}]
  %s4 = inlined_call_operand.vmem [shape: f32[1,128], index: 4, kind: input, shape index: {}]
  %s5 = inlined_call_operand.hbm [shape: bf16[128,128], index: 5, kind: input, shape index: {}]
  %s6 = inlined_call_operand.vmem [shape: f32[1,128], index: 6, kind: input, shape index: {}]
  %s7 = inlined_call_operand.vmem [shape: f32[1,128], index: 7, kind: input, shape index: {}]
  %s8 = inlined_call_operand.vmem [shape: f32[1,128], index: 8, kind: input, shape index: {}]
  %s9 = inlined_call_operand.hbm [shape: bf16[128,128], index: 9, kind: input, shape index: {}]
  %s10 = inlined_call_operand.vmem [shape: f32[1,128], index: 10, kind: input, shape index: {}]
  %s11 = inlined_call_operand.hbm [shape: f32[8,128], index: 11, kind: output, shape index: {}]
  %s12 = sld [smem:[#allocation0]]
  $region70: #{tpu_custom_call.1} parent=0
    _
  %s14 = ssub.s32 1, %s12
  %s15 = scalar_select 0, %s14, %s12
  $region1: #{tpu_custom_call.1} parent=0
    #allocation2 [shape = 'u8[4096]{0}', space=vmem, size = 0x1000, scoped, tag = 'input window, operand 0, single buffered']
    #allocation3 [shape = 's32[1]{0}', space=sflag, size = 0x4, scoped, tag = 'scoped memory for tpu_custom_call.1']
    #allocation4 [shape = 's32[1]{0}', space=sflag, size = 0x4, scoped, tag = 'scoped memory for tpu_custom_call.1']
    #allocation5 [shape = 'u8[32768]{0}', space=vmem, size = 0x8000, scoped, tag = 'input window, operand 1, single buffered']
    #allocation6 [shape = 's32[1]{0}', space=sflag, size = 0x4, scoped, tag = 'scoped memory for tpu_custom_call.1']
    #allocation7 [shape = 'u8[32768]{0}', space=vmem, size = 0x8000, scoped, tag = 'input window, operand 5, single buffered']
    #allocation8 [shape = 'u8[32768]{0}', space=vmem, size = 0x8000, scoped, tag = 'input window, operand 9, single buffered']
    #allocation9 [shape = 's32[1]{0}', space=sflag, size = 0x4, scoped, tag = 'scoped memory for tpu_custom_call.1']
    #allocation10 [shape = 'u8[4096]{0}', space=vmem, size = 0x1000, scoped, tag = 'output window, operand 0, single buffered']
    %16 = vsyncpa [#allocation3], 0
    %17 = vsyncpa [#allocation6], 0
    %18 = vsyncpa [#allocation9], 0
    %19 = vsyncpa [#allocation4], 0
    // Predicated region
    $region2: #{tpu_custom_call.1} parent=1 // pred_check
      _
    $region3: #{tpu_custom_call.1} parent=1 // pred_check_branch
      %21 = sbr.rel (0) target = $region5
    $region4: #{tpu_custom_call.1} parent=1 // pred_region
      %s23 = ssub.s32 128, 128
      %24 = vsyncadd [#allocation3], %s23
      %s26 = sshll.u32 [#allocation2], 4
      %s27 = int_to_ptr.vmem [resolvable:$true] %s26
      %29 = dma.hbm_to_vmem [thread:$0]  %s0, 128, %s27, [#allocation3]
    $region5: #{tpu_custom_call.1} parent=1 // pred_fallthru
      _
    // Predicated region
    $region6: #{tpu_custom_call.1} parent=1 // pred_check
      _
    $region7: #{tpu_custom_call.1} parent=1 // pred_check_branch
      %31 = sbr.rel (0) target = $region9
    $region8: #{tpu_custom_call.1} parent=1 // pred_region
      %s33 = ssub.s32 1024, 1024
      %34 = vsyncadd [#allocation6], %s33
      %s35 = sshll.u32 [#allocation5], 4
      %s36 = int_to_ptr.vmem [resolvable:$true] %s35
      %41 = dma.hbm_to_vmem [thread:$0]  %s1, 1024, %s36, [#allocation6], 64, 64, 4
    $region9: #{tpu_custom_call.1} parent=1 // pred_fallthru
      _
    // Predicated region
    $region10: #{tpu_custom_call.1} parent=1 // pred_check
      _
    $region11: #{tpu_custom_call.1} parent=1 // pred_check_branch
      %43 = sbr.rel (0) target = $region13
    $region12: #{tpu_custom_call.1} parent=1 // pred_region
      _
    $region13: #{tpu_custom_call.1} parent=1 // pred_fallthru
      _
    // Predicated region
    $region14: #{tpu_custom_call.1} parent=1 // pred_check
      _
    $region15: #{tpu_custom_call.1} parent=1 // pred_check_branch
      %45 = sbr.rel (0) target = $region17
    $region16: #{tpu_custom_call.1} parent=1 // pred_region
      _
    $region17: #{tpu_custom_call.1} parent=1 // pred_fallthru
      _
    // Predicated region
    $region18: #{tpu_custom_call.1} parent=1 // pred_check
      _
    $region19: #{tpu_custom_call.1} parent=1 // pred_check_branch
      %47 = sbr.rel (0) target = $region21
    $region20: #{tpu_custom_call.1} parent=1 // pred_region
      _
    $region21: #{tpu_custom_call.1} parent=1 // pred_fallthru
      _
    // Predicated region
    $region22: #{tpu_custom_call.1} parent=1 // pred_check
      _
    $region23: #{tpu_custom_call.1} parent=1 // pred_check_branch
      %49 = sbr.rel (0) target = $region25
    $region24: #{tpu_custom_call.1} parent=1 // pred_region
      %s51 = ssub.s32 1024, 1024
      %52 = vsyncadd [#allocation6], %s51
      %s53 = sshll.u32 [#allocation7], 4
      %s54 = int_to_ptr.vmem [resolvable:$true] %s53
      %59 = dma.hbm_to_vmem [thread:$0]  %s5, 1024, %s54, [#allocation6], 64, 64, 4
    $region25: #{tpu_custom_call.1} parent=1 // pred_fallthru
      _
    // Predicated region
    $region26: #{tpu_custom_call.1} parent=1 // pred_check
      _
    $region27: #{tpu_custom_call.1} parent=1 // pred_check_branch
      %61 = sbr.rel (0) target = $region29
    $region28: #{tpu_custom_call.1} parent=1 // pred_region
      _
    $region29: #{tpu_custom_call.1} parent=1 // pred_fallthru
      _
    // Predicated region
    $region30: #{tpu_custom_call.1} parent=1 // pred_check
      _
    $region31: #{tpu_custom_call.1} parent=1 // pred_check_branch
      %63 = sbr.rel (0) target = $region33
    $region32: #{tpu_custom_call.1} parent=1 // pred_region
      _
    $region33: #{tpu_custom_call.1} parent=1 // pred_fallthru
      _
    // Predicated region
    $region34: #{tpu_custom_call.1} parent=1 // pred_check
      _
    $region35: #{tpu_custom_call.1} parent=1 // pred_check_branch
      %65 = sbr.rel (0) target = $region37
    $region36: #{tpu_custom_call.1} parent=1 // pred_region
      _
    $region37: #{tpu_custom_call.1} parent=1 // pred_fallthru
      _
    // Predicated region
    $region38: #{tpu_custom_call.1} parent=1 // pred_check
      _
    $region39: #{tpu_custom_call.1} parent=1 // pred_check_branch
      %67 = sbr.rel (0) target = $region41
    $region40: #{tpu_custom_call.1} parent=1 // pred_region
      %s69 = ssub.s32 1024, 1024
      %70 = vsyncadd [#allocation9], %s69
      %s71 = sshll.u32 [#allocation8], 4
      %s72 = int_to_ptr.vmem [resolvable:$true] %s71
      %77 = dma.hbm_to_vmem [thread:$0]  %s9, 1024, %s72, [#allocation9], 64, 64, 4
    $region41: #{tpu_custom_call.1} parent=1 // pred_fallthru
      _
    // Predicated region
    $region42: #{tpu_custom_call.1} parent=1 // pred_check
      _
    $region43: #{tpu_custom_call.1} parent=1 // pred_check_branch
      %79 = sbr.rel (0) target = $region45
    $region44: #{tpu_custom_call.1} parent=1 // pred_region
      _
    $region45: #{tpu_custom_call.1} parent=1 // pred_fallthru
      _
    // Predicated region
    $region46: #{tpu_custom_call.1} parent=1 // pred_check
      _
    $region47: #{tpu_custom_call.1} parent=1 // pred_check_branch
      %81 = sbr.rel (0) target = $region49
    $region48: #{tpu_custom_call.1} parent=1 // pred_region
      %82 = dma.done [#allocation3], 128
    $region49: #{tpu_custom_call.1} parent=1 // pred_fallthru
      _
    // Predicated region
    $region50: #{tpu_custom_call.1} parent=1 // pred_check
      _
    $region51: #{tpu_custom_call.1} parent=1 // pred_check_branch
      %84 = sbr.rel (0) target = $region53
    $region52: #{tpu_custom_call.1} parent=1 // pred_region
      %85 = dma.done [#allocation6], 1024
    $region53: #{tpu_custom_call.1} parent=1 // pred_fallthru
      _
    // Predicated region
    $region54: #{tpu_custom_call.1} parent=1 // pred_check
      _
    $region55: #{tpu_custom_call.1} parent=1 // pred_check_branch
      %87 = sbr.rel (0) target = $region57
    $region56: #{tpu_custom_call.1} parent=1 // pred_region
      %88 = dma.done [#allocation6], 1024
    $region57: #{tpu_custom_call.1} parent=1 // pred_fallthru
      _
    // Predicated region
    $region58: #{tpu_custom_call.1} parent=1 // pred_check
      _
    $region59: #{tpu_custom_call.1} parent=1 // pred_check_branch
      %90 = sbr.rel (0) target = $region61
    $region60: #{tpu_custom_call.1} parent=1 // pred_region
      %91 = dma.done [#allocation9], 1024
    $region61: #{tpu_custom_call.1} parent=1 // pred_fallthru
      _
    %v93 = vld [vmem:[#allocation2] sm:$0xff]
    %v94 = vld [vmem:[#allocation5] sm:$0xf]
    %v95 = vld [vmem:[#allocation5 + $0x4] sm:$0xf]
    %v96 = vld [vmem:[#allocation5 + $0x8] sm:$0xf]
    %v97 = vld [vmem:[#allocation5 + $0xc] sm:$0xf]
    %v98 = vld [vmem:[#allocation5 + $0x10] sm:$0xf]
    %v99 = vld [vmem:[#allocation5 + $0x14] sm:$0xf]
    %v100 = vld [vmem:[#allocation5 + $0x18] sm:$0xf]
    %v101 = vld [vmem:[#allocation5 + $0x1c] sm:$0xf]
    %v102 = vld [vmem:[#allocation5 + $0x20] sm:$0xf]
    %v103 = vld [vmem:[#allocation5 + $0x24] sm:$0xf]
    %v104 = vld [vmem:[#allocation5 + $0x28] sm:$0xf]
    %v105 = vld [vmem:[#allocation5 + $0x2c] sm:$0xf]
    %v106 = vld [vmem:[#allocation5 + $0x30] sm:$0xf]
    %v107 = vld [vmem:[#allocation5 + $0x34] sm:$0xf]
    %v108 = vld [vmem:[#allocation5 + $0x38] sm:$0xf]
    %v109 = vld [vmem:[#allocation5 + $0x3c] sm:$0xf]
    %v110 = vld [vmem:[%s2] sm:$0x1]
    %v111 = vpack.c.bf16 %v93, %v93
    %v113 = vlaneseq
    %v114 = vshrl.u32 %v113, 7
    %v115 = vsub.s32 0, %v114
    %v116 = vrot.slane %v110, %v115
    %v134 = vunpack.c.l.b16 %v94
    %v135 = vunpack.c.l.b16 %v95
    %v136 = vunpack.c.l.b16 %v96
    %v137 = vunpack.c.l.b16 %v97
    %v138 = vunpack.c.l.b16 %v98
    %v139 = vunpack.c.l.b16 %v99
    %v140 = vunpack.c.l.b16 %v100
    %v141 = vunpack.c.l.b16 %v101
    %v142 = vunpack.c.l.b16 %v102
    %v143 = vunpack.c.l.b16 %v103
    %v144 = vunpack.c.l.b16 %v104
    %v145 = vunpack.c.l.b16 %v105
    %v146 = vunpack.c.l.b16 %v106
    %v147 = vunpack.c.l.b16 %v107
    %v148 = vunpack.c.l.b16 %v108
    %v149 = vunpack.c.l.b16 %v109
    %v150 = vpack.c.b16 %v135, %v134
    %v151 = vpack.c.b16 %v137, %v136
    %v152 = vpack.c.b16 %v139, %v138
    %v153 = vpack.c.b16 %v141, %v140
    %v154 = vpack.c.b16 %v143, %v142
    %v155 = vpack.c.b16 %v145, %v144
    %v156 = vpack.c.b16 %v147, %v146
    %v157 = vpack.c.b16 %v149, %v148
    %166 = vmatprep.subr.bf16.mxu0 0
    %167 = vmatpush1.bf16.msra.mxu0 %v150
    %168 = vmatprep.subr.bf16.mxu0 0
    %169 = vmatpush1.bf16.msra.mxu0 %v151
    %170 = vmatprep.subr.bf16.mxu0 0
    %171 = vmatpush1.bf16.msra.mxu0 %v152
    %172 = vmatprep.subr.bf16.mxu0 0
    %173 = vmatpush1.bf16.msra.mxu0 %v153
    %174 = vmatprep.subr.bf16.mxu0 0
    %175 = vmatpush1.bf16.msra.mxu0 %v154
    %176 = vmatprep.subr.bf16.mxu0 0
    %177 = vmatpush1.bf16.msra.mxu0 %v155
    %178 = vmatprep.subr.bf16.mxu0 0
    %179 = vmatpush1.bf16.msra.mxu0 %v156
    %180 = vmatprep.subr.bf16.mxu0 0
    %181 = vmatpush1.bf16.msra.mxu0 %v157
    %182 = vmatprep.subr.bf16.mxu0 0
    %183 = vmatpush1.bf16.msra.mxu0 0
    %184 = vmatprep.subr.bf16.mxu0 0
    %185 = vmatpush1.bf16.msra.mxu0 0
    %186 = vmatprep.subr.bf16.mxu0 0
    %187 = vmatpush1.bf16.msra.mxu0 0
    %188 = vmatprep.subr.bf16.mxu0 0
    %189 = vmatpush1.bf16.msra.mxu0 0
    %190 = vmatprep.subr.bf16.mxu0 0
    %191 = vmatpush1.bf16.msra.mxu0 0
    %192 = vmatprep.subr.bf16.mxu0 0
    %193 = vmatpush1.bf16.msra.mxu0 0
    %194 = vmatprep.subr.bf16.mxu0 0
    %195 = vmatpush1.bf16.msra.mxu0 0
    %196 = vmatprep.subr.bf16.mxu0 0
    %197 = vmatpush1.bf16.msra.mxu0 0
    %198 = vmatprep.mubr.bf16.mxu0 0
    %199 = vmatmul.mubr.bf16.gmra.mrb[0].mxu0 %v111
    %v200 = vpop.f32.mrb[0].mxu0
    %v201 = vadd.f32 %v116, %v200
    %v202 = vpop.f32.mrb[0].mxu0
    %v203 = vpop.f32.mrb[0].mxu0
    %v204 = vpop.f32.mrb[0].mxu0
    %205 = vdwg.mxu0
    %v206 = vld [vmem:[%s3] sm:$0x1]
    %v207 = vld [vmem:[%s4] sm:$0x1]
    %v208 = vrot.slane %v201, 4
    %v209 = vadd.f32 %v201, %v208
    %v210 = vrot.slane %v209, 2
    %v211 = vadd.f32 %v209, %v210
    %v212 = vrot.slane %v211, 1
    %v213 = vadd.f32 %v211, %v212
    %v214 = vmul.f32 %v213, 0.125
    %v215 = vsub.f32 %v201, %v214
    %v216 = vmul.f32 %v215, %v215
    %v217 = vrot.slane %v216, 4
    %v218 = vadd.f32 %v216, %v217
    %v219 = vrot.slane %v218, 2
    %v220 = vadd.f32 %v218, %v219
    %v221 = vrot.slane %v220, 1
    %v222 = vadd.f32 %v220, %v221
    %v223 = vmul.f32 %v222, 0.125
    %v225 = vlaneseq
    %v226 = vshrl.u32 %v225, 7
    %v227 = vsub.s32 0, %v226
    %v228 = vrot.slane %v206, %v227
    %v230 = vmul.f32 %v228, %v215
    %v231 = vadd.f32 %v223, 1e-05
    %v232 = vrsqrt.pop %v231
    %v233 = vmul.f32 %v230, %v232
    %v235 = vlaneseq
    %v236 = vshrl.u32 %v235, 7
    %v237 = vsub.s32 0, %v236
    %v238 = vrot.slane %v207, %v237
    %v240 = vadd.f32 %v233, %v238
    %v241 = vmax.f32 %v240, 0.0
    %v242 = vld [vmem:[#allocation7] sm:$0xf]
    %v243 = vld [vmem:[#allocation7 + $0x4] sm:$0xf]
    %v244 = vld [vmem:[#allocation7 + $0x8] sm:$0xf]
    %v245 = vld [vmem:[#allocation7 + $0xc] sm:$0xf]
    %v246 = vld [vmem:[#allocation7 + $0x10] sm:$0xf]
    %v247 = vld [vmem:[#allocation7 + $0x14] sm:$0xf]
    %v248 = vld [vmem:[#allocation7 + $0x18] sm:$0xf]
    %v249 = vld [vmem:[#allocation7 + $0x1c] sm:$0xf]
    %v250 = vld [vmem:[#allocation7 + $0x20] sm:$0xf]
    %v251 = vld [vmem:[#allocation7 + $0x24] sm:$0xf]
    %v252 = vld [vmem:[#allocation7 + $0x28] sm:$0xf]
    %v253 = vld [vmem:[#allocation7 + $0x2c] sm:$0xf]
    %v254 = vld [vmem:[#allocation7 + $0x30] sm:$0xf]
    %v255 = vld [vmem:[#allocation7 + $0x34] sm:$0xf]
    %v256 = vld [vmem:[#allocation7 + $0x38] sm:$0xf]
    %v257 = vld [vmem:[#allocation7 + $0x3c] sm:$0xf]
    %v258 = vld [vmem:[%s6] sm:$0x1]
    %v259 = vpack.c.bf16 %v241, %v241
    %v261 = vlaneseq
    %v262 = vshrl.u32 %v261, 7
    %v263 = vsub.s32 0, %v262
    %v264 = vrot.slane %v258, %v263
    %v282 = vunpack.c.l.b16 %v242
    %v283 = vunpack.c.l.b16 %v243
    %v284 = vunpack.c.l.b16 %v244
    %v285 = vunpack.c.l.b16 %v245
    %v286 = vunpack.c.l.b16 %v246
    %v287 = vunpack.c.l.b16 %v247
    %v288 = vunpack.c.l.b16 %v248
    %v289 = vunpack.c.l.b16 %v249
    %v290 = vunpack.c.l.b16 %v250
    %v291 = vunpack.c.l.b16 %v251
    %v292 = vunpack.c.l.b16 %v252
    %v293 = vunpack.c.l.b16 %v253
    %v294 = vunpack.c.l.b16 %v254
    %v295 = vunpack.c.l.b16 %v255
    %v296 = vunpack.c.l.b16 %v256
    %v297 = vunpack.c.l.b16 %v257
    %v298 = vpack.c.b16 %v283, %v282
    %v299 = vpack.c.b16 %v285, %v284
    %v300 = vpack.c.b16 %v287, %v286
    %v301 = vpack.c.b16 %v289, %v288
    %v302 = vpack.c.b16 %v291, %v290
    %v303 = vpack.c.b16 %v293, %v292
    %v304 = vpack.c.b16 %v295, %v294
    %v305 = vpack.c.b16 %v297, %v296
    %314 = vmatprep.subr.bf16.mxu0 0
    %315 = vmatpush1.bf16.msra.mxu0 %v298
    %316 = vmatprep.subr.bf16.mxu0 0
    %317 = vmatpush1.bf16.msra.mxu0 %v299
    %318 = vmatprep.subr.bf16.mxu0 0
    %319 = vmatpush1.bf16.msra.mxu0 %v300
    %320 = vmatprep.subr.bf16.mxu0 0
    %321 = vmatpush1.bf16.msra.mxu0 %v301
    %322 = vmatprep.subr.bf16.mxu0 0
    %323 = vmatpush1.bf16.msra.mxu0 %v302
    %324 = vmatprep.subr.bf16.mxu0 0
    %325 = vmatpush1.bf16.msra.mxu0 %v303
    %326 = vmatprep.subr.bf16.mxu0 0
    %327 = vmatpush1.bf16.msra.mxu0 %v304
    %328 = vmatprep.subr.bf16.mxu0 0
    %329 = vmatpush1.bf16.msra.mxu0 %v305
    %330 = vmatprep.subr.bf16.mxu0 0
    %331 = vmatpush1.bf16.msra.mxu0 0
    %332 = vmatprep.subr.bf16.mxu0 0
    %333 = vmatpush1.bf16.msra.mxu0 0
    %334 = vmatprep.subr.bf16.mxu0 0
    %335 = vmatpush1.bf16.msra.mxu0 0
    %336 = vmatprep.subr.bf16.mxu0 0
    %337 = vmatpush1.bf16.msra.mxu0 0
    %338 = vmatprep.subr.bf16.mxu0 0
    %339 = vmatpush1.bf16.msra.mxu0 0
    %340 = vmatprep.subr.bf16.mxu0 0
    %341 = vmatpush1.bf16.msra.mxu0 0
    %342 = vmatprep.subr.bf16.mxu0 0
    %343 = vmatpush1.bf16.msra.mxu0 0
    %344 = vmatprep.subr.bf16.mxu0 0
    %345 = vmatpush1.bf16.msra.mxu0 0
    %346 = vmatprep.mubr.bf16.mxu0 0
    %347 = vmatmul.mubr.bf16.gmra.mrb[0].mxu0 %v259
    %v348 = vpop.f32.mrb[0].mxu0
    %v349 = vadd.f32 %v264, %v348
    %v350 = vpop.f32.mrb[0].mxu0
    %v351 = vpop.f32.mrb[0].mxu0
    %v352 = vpop.f32.mrb[0].mxu0
    %353 = vdwg.mxu0
    %v354 = vld [vmem:[%s7] sm:$0x1]
    %v355 = vld [vmem:[%s8] sm:$0x1]
    %v356 = vrot.slane %v349, 4
    %v357 = vadd.f32 %v349, %v356
    %v358 = vrot.slane %v357, 2
    %v359 = vadd.f32 %v357, %v358
    %v360 = vrot.slane %v359, 1
    %v361 = vadd.f32 %v359, %v360
    %v362 = vmul.f32 %v361, 0.125
    %v363 = vsub.f32 %v349, %v362
    %v364 = vmul.f32 %v363, %v363
    %v365 = vrot.slane %v364, 4
    %v366 = vadd.f32 %v364, %v365
    %v367 = vrot.slane %v366, 2
    %v368 = vadd.f32 %v366, %v367
    %v369 = vrot.slane %v368, 1
    %v370 = vadd.f32 %v368, %v369
    %v371 = vmul.f32 %v370, 0.125
    %v373 = vlaneseq
    %v374 = vshrl.u32 %v373, 7
    %v375 = vsub.s32 0, %v374
    %v376 = vrot.slane %v354, %v375
    %v378 = vmul.f32 %v376, %v363
    %v379 = vadd.f32 %v371, 1e-05
    %v380 = vrsqrt.pop %v379
    %v381 = vmul.f32 %v378, %v380
    %v383 = vlaneseq
    %v384 = vshrl.u32 %v383, 7
    %v385 = vsub.s32 0, %v384
    %v386 = vrot.slane %v355, %v385
    %v388 = vadd.f32 %v381, %v386
    %v389 = vmax.f32 %v388, 0.0
    %v390 = vld [vmem:[#allocation8] sm:$0xf]
    %v391 = vld [vmem:[#allocation8 + $0x4] sm:$0xf]
    %v392 = vld [vmem:[#allocation8 + $0x8] sm:$0xf]
    %v393 = vld [vmem:[#allocation8 + $0xc] sm:$0xf]
    %v394 = vld [vmem:[#allocation8 + $0x10] sm:$0xf]
    %v395 = vld [vmem:[#allocation8 + $0x14] sm:$0xf]
    %v396 = vld [vmem:[#allocation8 + $0x18] sm:$0xf]
    %v397 = vld [vmem:[#allocation8 + $0x1c] sm:$0xf]
    %v398 = vld [vmem:[#allocation8 + $0x20] sm:$0xf]
    %v399 = vld [vmem:[#allocation8 + $0x24] sm:$0xf]
    %v400 = vld [vmem:[#allocation8 + $0x28] sm:$0xf]
    %v401 = vld [vmem:[#allocation8 + $0x2c] sm:$0xf]
    %v402 = vld [vmem:[#allocation8 + $0x30] sm:$0xf]
    %v403 = vld [vmem:[#allocation8 + $0x34] sm:$0xf]
    %v404 = vld [vmem:[#allocation8 + $0x38] sm:$0xf]
    %v405 = vld [vmem:[#allocation8 + $0x3c] sm:$0xf]
    %v406 = vld [vmem:[%s10] sm:$0x1]
    %v407 = vpack.c.bf16 %v389, %v389
    %v409 = vlaneseq
    %v410 = vshrl.u32 %v409, 7
    %v411 = vsub.s32 0, %v410
    %v412 = vrot.slane %v406, %v411
    %v430 = vunpack.c.l.b16 %v390
    %v431 = vunpack.c.l.b16 %v391
    %v432 = vunpack.c.l.b16 %v392
    %v433 = vunpack.c.l.b16 %v393
    %v434 = vunpack.c.l.b16 %v394
    %v435 = vunpack.c.l.b16 %v395
    %v436 = vunpack.c.l.b16 %v396
    %v437 = vunpack.c.l.b16 %v397
    %v438 = vunpack.c.l.b16 %v398
    %v439 = vunpack.c.l.b16 %v399
    %v440 = vunpack.c.l.b16 %v400
    %v441 = vunpack.c.l.b16 %v401
    %v442 = vunpack.c.l.b16 %v402
    %v443 = vunpack.c.l.b16 %v403
    %v444 = vunpack.c.l.b16 %v404
    %v445 = vunpack.c.l.b16 %v405
    %v446 = vpack.c.b16 %v431, %v430
    %v447 = vpack.c.b16 %v433, %v432
    %v448 = vpack.c.b16 %v435, %v434
    %v449 = vpack.c.b16 %v437, %v436
    %v450 = vpack.c.b16 %v439, %v438
    %v451 = vpack.c.b16 %v441, %v440
    %v452 = vpack.c.b16 %v443, %v442
    %v453 = vpack.c.b16 %v445, %v444
    %462 = vmatprep.subr.bf16.mxu0 0
    %463 = vmatpush1.bf16.msra.mxu0 %v446
    %464 = vmatprep.subr.bf16.mxu0 0
    %465 = vmatpush1.bf16.msra.mxu0 %v447
    %466 = vmatprep.subr.bf16.mxu0 0
    %467 = vmatpush1.bf16.msra.mxu0 %v448
    %468 = vmatprep.subr.bf16.mxu0 0
    %469 = vmatpush1.bf16.msra.mxu0 %v449
    %470 = vmatprep.subr.bf16.mxu0 0
    %471 = vmatpush1.bf16.msra.mxu0 %v450
    %472 = vmatprep.subr.bf16.mxu0 0
    %473 = vmatpush1.bf16.msra.mxu0 %v451
    %474 = vmatprep.subr.bf16.mxu0 0
    %475 = vmatpush1.bf16.msra.mxu0 %v452
    %476 = vmatprep.subr.bf16.mxu0 0
    %477 = vmatpush1.bf16.msra.mxu0 %v453
    %478 = vmatprep.subr.bf16.mxu0 0
    %479 = vmatpush1.bf16.msra.mxu0 0
    %480 = vmatprep.subr.bf16.mxu0 0
    %481 = vmatpush1.bf16.msra.mxu0 0
    %482 = vmatprep.subr.bf16.mxu0 0
    %483 = vmatpush1.bf16.msra.mxu0 0
    %484 = vmatprep.subr.bf16.mxu0 0
    %485 = vmatpush1.bf16.msra.mxu0 0
    %486 = vmatprep.subr.bf16.mxu0 0
    %487 = vmatpush1.bf16.msra.mxu0 0
    %488 = vmatprep.subr.bf16.mxu0 0
    %489 = vmatpush1.bf16.msra.mxu0 0
    %490 = vmatprep.subr.bf16.mxu0 0
    %491 = vmatpush1.bf16.msra.mxu0 0
    %492 = vmatprep.subr.bf16.mxu0 0
    %493 = vmatpush1.bf16.msra.mxu0 0
    %494 = vmatprep.mubr.bf16.mxu0 0
    %495 = vmatmul.mubr.bf16.gmra.mrb[0].mxu0 %v407
    %v496 = vpop.f32.mrb[0].mxu0
    %v497 = vadd.f32 %v412, %v496
    %v498 = vpop.f32.mrb[0].mxu0
    %v499 = vpop.f32.mrb[0].mxu0
    %v500 = vpop.f32.mrb[0].mxu0
    %501 = vdwg.mxu0
    %502 = vst [vmem:[#allocation10] sm:$0xff] %v497
    // Predicated region
    $region62: #{tpu_custom_call.1} parent=1 // pred_check
      _
    $region63: #{tpu_custom_call.1} parent=1 // pred_check_branch
      %504 = sbr.rel (0) target = $region65
    $region64: #{tpu_custom_call.1} parent=1 // pred_region
      %s506 = ssub.s32 128, 128
      %507 = vsyncadd [#allocation4], %s506
      %s509 = sshll.u32 [#allocation10], 4
      %s510 = int_to_ptr.vmem [resolvable:$true] %s509
      %512 = dma.vmem_to_hbm [thread:$0]  %s510, 128, %s11, [#allocation4]
    $region65: #{tpu_custom_call.1} parent=1 // pred_fallthru
      _
    // Predicated region
    $region66: #{tpu_custom_call.1} parent=1 // pred_check
      _
    $region67: #{tpu_custom_call.1} parent=1 // pred_check_branch
      %514 = sbr.rel (0) target = $region69
    $region68: #{tpu_custom_call.1} parent=1 // pred_region
      %515 = dma.done [#allocation4], 128
    $region69: #{tpu_custom_call.1} parent=1 // pred_fallthru
      _
    %516 = vsyncpa [#allocation3], 1
    %517 = vsyncpa [#allocation6], 1
    %518 = vsyncpa [#allocation9], 1
    %519 = vsyncpa [#allocation4], 1

</llo_original>
